<compile_context>
chip_gen: v7x
topology: tpu7x:2x2x1
jax: 0.10.0
libtpu: 0.0.40
codegen_flags: <defaults>
</compile_context>

<pallas_src>
import jax
import jax.numpy as jnp
from jax.experimental import pallas as pl
from jax.experimental.pallas import tpu as pltpu

LANE = 128                 # lane width: hidden/out feature dims are zero-padded to this
SUBLANE = 8                # f32 sublane tile
MAX_PHI_ROWS = 4096        # target rows (batch_tile * N) fed to each phi matmul per grid step
VMEM_LIMIT_BYTES = 32 * 1024 * 1024   # scoped VMEM limit, valid on v5e/v6e/v7x


def _make_deepsets_kernel(n_phi_layers, n_set_pad, n_set_true, d_in, dot_dtype):
    """Kernel operands:
         x_ref : [bt*n_set_pad, d_in]    f32  (dense feature dim, no lane padding in HBM)
         w_ref : [(n_phi+2)*128, 128]    dot_dtype weight slab (zero-padded blocks)
         b_ref : [(n_phi+2), 128]        f32 bias slab
         o_ref : [bt, 128]               f32 lane-dense output
    """

    def kernel(x_ref, w_ref, b_ref, o_ref):
        bt = o_ref.shape[0]

        def dense(h2d, i, activate):
            # Weights live at block i of the slab.  Activations are cast to the dot dtype
            # only at the MXU boundary; bias add / tanh stay f32 (v5e has no bf16 VPU/EUP).
            w = w_ref[i * LANE:(i + 1) * LANE, :]
            y = jnp.dot(h2d.astype(dot_dtype), w,
                        preferred_element_type=jnp.float32) + b_ref[i:i + 1, :]
            return jnp.tanh(y) if activate else y

        # ---- phi layer 0: contract over the true in_dim (K=3 -> one MXU pass; keep f32) ----
        w0 = w_ref[0:d_in, :].astype(jnp.float32)
        h = jnp.tanh(jnp.dot(x_ref[...], w0,
                             preferred_element_type=jnp.float32) + b_ref[0:1, :])

        # ---- remaining phi layers: [M,128] x [128,128] MXU dots on the flat activation ----
        for i in range(1, n_phi_layers):
            h = dense(h, i, activate=True)

        # ---- permutation-invariant sum pooling over the set axis ----
        h3 = h.reshape(bt, n_set_pad, LANE)
        if n_set_pad != n_set_true:
            # padded points are NOT zero after layer 0 (tanh(bias)); mask before pooling
            pt = jax.lax.broadcasted_iota(jnp.int32, (bt, n_set_pad, LANE), 1)
            h3 = jnp.where(pt < n_set_true, h3, 0.0)
        pooled = jnp.sum(h3, axis=1)                       # [bt, 128] f32

        # ---- classifier: (Dropout=id) Linear -> Tanh -> (Dropout=id) Linear ----
        z = dense(pooled, n_phi_layers, activate=True)
        out = dense(z, n_phi_layers + 1, activate=False)

        o_ref[...] = out.astype(o_ref.dtype)               # unmasked lane-dense store

    return kernel


def _choose_batch_tile(B, n_set_pad, max_rows=MAX_PHI_ROWS):
    """Largest divisor of B such that:
         (a) the output block is sublane-friendly (bt % 8 == 0 or bt == B),
         (b) rows per grid step bt*n_set_pad stay within the VMEM-derived row budget,
         (c) the grid has >= 2 steps whenever B allows (keeps both v7x TensorCores busy)."""
    divisors = [d for d in range(1, B + 1) if B % d == 0]
    friendly = [d for d in divisors if d % SUBLANE == 0 or d == B]
    row_cap = max(1, max_rows // n_set_pad)
    multi_step = [d for d in friendly if d <= row_cap and d < B]
    single_step = [d for d in friendly if d <= row_cap]
    if multi_step:
        return max(multi_step)
    if single_step:
        return max(single_step)
    return min(friendly)   # pathological huge-N fallback (see TODO at top of file)


def deepsets_forward(x, phi_params, cls_params, *, batch_tile=None, dot_dtype=jnp.bfloat16):
    """x: [B, N, in_dim] f32. phi_params: list of (W[d_in,d_out], b[d_out]).
       cls_params: [(W1,b1), (W2,b2)]. Returns [B, out_dim] f32 (eval mode)."""
    B, N, D = x.shape
    out_dim = cls_params[-1][0].shape[1]
    params = list(phi_params) + list(cls_params)
    n_phi = len(phi_params)
    n_total = n_phi + 2
    assert n_phi >= 1
    for w, _ in params:
        assert w.shape[0] <= LANE and w.shape[1] <= LANE

    # ---- pack all weights into one dot-dtype slab + one f32 bias slab (3 input DMAs) ----
    w_blocks, b_rows = [], []
    for w, b in params:
        d_i, d_o = w.shape
        w_blocks.append(jnp.zeros((LANE, LANE), dot_dtype).at[:d_i, :d_o]
                        .set(w.astype(dot_dtype)))
        b_rows.append(jnp.zeros((LANE,), jnp.float32).at[:d_o].set(b.astype(jnp.float32)))
    w_slab = jnp.concatenate(w_blocks, axis=0)     # [(n_phi+2)*128, 128]
    b_slab = jnp.stack(b_rows, axis=0)             # [(n_phi+2), 128]

    # ---- pad the set axis to a multiple of 8 (masked in-kernel); feature dim stays dense ----
    n_pad = ((N + SUBLANE - 1) // SUBLANE) * SUBLANE
    if n_pad != N:
        x = jnp.concatenate([x, jnp.zeros((B, n_pad - N, D), x.dtype)], axis=1)
    x_rows = x.reshape(B * n_pad, D).astype(jnp.float32)   # [B*N_pad, D] dense in HBM

    if batch_tile is None:
        batch_tile = _choose_batch_tile(B, n_pad)
    assert B % batch_tile == 0, f"batch_tile={batch_tile} must divide B={B}"
    grid = (B // batch_tile,)

    kernel = _make_deepsets_kernel(n_phi, n_pad, N, D, dot_dtype)

    def build(single_buffer_weights):
        const = {"pipeline_mode": pl.Buffered(1)} if single_buffer_weights else {}
        return pl.pallas_call(
            kernel,
            out_shape=jax.ShapeDtypeStruct((B, LANE), jnp.float32),
            grid_spec=pltpu.PrefetchScalarGridSpec(
                num_scalar_prefetch=0,
                grid=grid,
                in_specs=[
                    pl.BlockSpec((batch_tile * n_pad, D), lambda i: (i, 0)),
                    pl.BlockSpec((n_total * LANE, LANE), lambda i: (0, 0), **const),
                    pl.BlockSpec((n_total, LANE), lambda i: (0, 0), **const),
                ],
                out_specs=pl.BlockSpec((batch_tile, LANE), lambda i: (i, 0)),
            ),
            compiler_params=pltpu.CompilerParams(
                dimension_semantics=("parallel",),
                vmem_limit_bytes=VMEM_LIMIT_BYTES),
        )

    try:
        out_pad = build(True)(x_rows, w_slab, b_slab)
    except Exception:
        # Fallback if this JAX build rejects single-buffered constant-index inputs.
        out_pad = build(False)(x_rows, w_slab, b_slab)

    return out_pad[:, :out_dim]   # drop the lane padding outside the kernel


def _init_linear(key, fan_in, fan_out):
    """Deterministic init mimicking torch.nn.Linear default (uniform +-1/sqrt(fan_in))."""
    kw, kb = jax.random.split(key)
    bound = 1.0 / jnp.sqrt(jnp.float32(fan_in))
    w = jax.random.uniform(kw, (fan_in, fan_out), jnp.float32, -bound, bound)
    b = jax.random.uniform(kb, (fan_out,), jnp.float32, -bound, bound)
    return w, b


def _reference(x, phi_params, cls_params, dot_dtype=jnp.float32):
    """Pure-JAX reference.  With dot_dtype=bf16 it mirrors the kernel's numeric policy
    (bf16-rounded weights, bf16 dot operands with f32 accumulation, layer 0 in f32)."""
    def q(w):
        return w.astype(dot_dtype).astype(jnp.float32)

    h = x
    for li, (w, b) in enumerate(phi_params):
        if li == 0:
            y = jnp.einsum("bnd,dh->bnh", h, q(w), preferred_element_type=jnp.float32)
        else:
            y = jnp.einsum("bnd,dh->bnh", h.astype(dot_dtype), w.astype(dot_dtype),
                           preferred_element_type=jnp.float32)
        h = jnp.tanh(y + b[None, None, :])
    pooled = jnp.sum(h, axis=1)

    def dense(a, w, b, activate):
        y = jnp.dot(a.astype(dot_dtype), w.astype(dot_dtype),
                    preferred_element_type=jnp.float32) + b[None, :]
        return jnp.tanh(y) if activate else y

    (w1, b1), (w2, b2) = cls_params
    z = dense(pooled, w1, b1, True)
    return dense(z, w2, b2, False)


if __name__ == "__main__":
    # Small shapes consistent with the module: point clouds (xyz), ModelNet10-style classes.
    B, N = 2, 8            # batch_size, points per set
    in_dim, hidden_dim, out_dim, n_layers = 3, 32, 10, 3

    key = jax.random.PRNGKey(0)
    keys = jax.random.split(key, 1 + n_layers + 2)

    x = jax.random.normal(keys[0], (B, N, in_dim), jnp.float32)   # data.x.view(B, -1, in_dim)

    phi_params = []
    d = in_dim
    for i in range(n_layers):
        phi_params.append(_init_linear(keys[1 + i], d, hidden_dim))
        d = hidden_dim
    cls_params = [
        _init_linear(keys[1 + n_layers], hidden_dim, hidden_dim),
        _init_linear(keys[2 + n_layers], hidden_dim, out_dim),
    ]

    out = deepsets_forward(x, phi_params, cls_params)   # bf16-at-the-MXU by default
    out = jax.block_until_ready(out)
    assert out.shape == (B, out_dim)

    # exact-policy reference (same bf16 rounding at the dot boundary as the kernel)
    ref_matched = _reference(x, phi_params, cls_params, dot_dtype=jnp.bfloat16)
    assert jnp.allclose(out, ref_matched, atol=2e-3, rtol=2e-3), \
        "mismatch vs matched-dtype pure-JAX reference"

    # coarse sanity check against the pure-f32 module semantics (only bf16 weight/operand
    # quantization separates the two; review-acknowledged trade-off on v6e/v7x)
    ref_f32 = _reference(x, phi_params, cls_params, dot_dtype=jnp.float32)
    assert jnp.allclose(out, ref_f32, atol=5e-2, rtol=5e-2), \
        "drifted too far from f32 module semantics"

    print("KERNEL_OK")
</pallas_src>

<mosaic_0001>
module attributes {stable_mosaic.version = 11 : i64} {
  func.func @kernel(%arg0: i32, %arg1: memref<16x3xf32, #tpu.memory_space<vmem>>, %arg2: memref<640x128xbf16, #tpu.memory_space<vmem>>, %arg3: memref<5x128xf32, #tpu.memory_space<vmem>>, %arg4: memref<2x128xf32, #tpu.memory_space<vmem>>) attributes {dimension_semantics = [#tpu.dimension_semantics<parallel>], iteration_bounds = array<i64: 1>, scalar_prefetch = 0 : i64, scratch_operands = 0 : i64, tpu.core_type = #tpu.core_type<tc>, window_params = [{transform_indices = @transform_0, window_bounds = array<i64: 16, 3>}, {pipeline_mode = #tpu.pipeline_mode<synchronous>, transform_indices = @transform_1, window_bounds = array<i64: 640, 128>}, {pipeline_mode = #tpu.pipeline_mode<synchronous>, transform_indices = @transform_2, window_bounds = array<i64: 5, 128>}, {transform_indices = @transform_3, window_bounds = array<i64: 2, 128>}]} {
    %c0 = arith.constant 0 : index
    %c0_0 = arith.constant 0 : index
    %0 = vector.load %arg2[%c0, %c0_0] : memref<640x128xbf16, #tpu.memory_space<vmem>>, vector<3x128xbf16>
    %1 = arith.extf %0 : vector<3x128xbf16> to vector<3x128xf32>
    %c0_1 = arith.constant 0 : index
    %c0_2 = arith.constant 0 : index
    %2 = vector.load %arg1[%c0_1, %c0_2] : memref<16x3xf32, #tpu.memory_space<vmem>>, vector<16x3xf32>
    %cst = arith.constant dense<0.000000e+00> : vector<16x128xf32>
    %3 = tpu.matmul %2, %1, %cst {dimension_numbers = #tpu.dot_dimension_numbers<[1], [0], [0], [1], [0, 0, 1, 1], [], []>} : vector<16x3xf32>, vector<3x128xf32>, vector<16x128xf32> -> vector<16x128xf32>
    %c0_3 = arith.constant 0 : index
    %c0_4 = arith.constant 0 : index
    %4 = vector.load %arg3[%c0_3, %c0_4] : memref<5x128xf32, #tpu.memory_space<vmem>>, vector<1x128xf32>
    %5 = vector.broadcast %4 : vector<1x128xf32> to vector<16x128xf32>
    %6 = arith.addf %3, %5 : vector<16x128xf32>
    %7 = math.tanh %6 : vector<16x128xf32>
    %c128 = arith.constant 128 : index
    %c0_5 = arith.constant 0 : index
    %8 = vector.load %arg2[%c128, %c0_5] : memref<640x128xbf16, #tpu.memory_space<vmem>>, vector<128x128xbf16>
    %9 = arith.truncf %7 : vector<16x128xf32> to vector<16x128xbf16>
    %cst_6 = arith.constant dense<0.000000e+00> : vector<16x128xf32>
    %10 = tpu.matmul %9, %8, %cst_6 {dimension_numbers = #tpu.dot_dimension_numbers<[1], [0], [0], [1], [0, 0, 1, 1], [], []>} : vector<16x128xbf16>, vector<128x128xbf16>, vector<16x128xf32> -> vector<16x128xf32>
    %c1 = arith.constant 1 : index
    %c0_7 = arith.constant 0 : index
    %11 = vector.load %arg3[%c1, %c0_7] : memref<5x128xf32, #tpu.memory_space<vmem>>, vector<1x128xf32>
    %12 = vector.broadcast %11 : vector<1x128xf32> to vector<16x128xf32>
    %13 = arith.addf %10, %12 : vector<16x128xf32>
    %14 = math.tanh %13 : vector<16x128xf32>
    %c256 = arith.constant 256 : index
    %c0_8 = arith.constant 0 : index
    %15 = vector.load %arg2[%c256, %c0_8] : memref<640x128xbf16, #tpu.memory_space<vmem>>, vector<128x128xbf16>
    %16 = arith.truncf %14 : vector<16x128xf32> to vector<16x128xbf16>
    %cst_9 = arith.constant dense<0.000000e+00> : vector<16x128xf32>
    %17 = tpu.matmul %16, %15, %cst_9 {dimension_numbers = #tpu.dot_dimension_numbers<[1], [0], [0], [1], [0, 0, 1, 1], [], []>} : vector<16x128xbf16>, vector<128x128xbf16>, vector<16x128xf32> -> vector<16x128xf32>
    %c2 = arith.constant 2 : index
    %c0_10 = arith.constant 0 : index
    %18 = vector.load %arg3[%c2, %c0_10] : memref<5x128xf32, #tpu.memory_space<vmem>>, vector<1x128xf32>
    %19 = vector.broadcast %18 : vector<1x128xf32> to vector<16x128xf32>
    %20 = arith.addf %17, %19 : vector<16x128xf32>
    %21 = math.tanh %20 : vector<16x128xf32>
    %22 = vector.shape_cast %21 : vector<16x128xf32> to vector<2x8x128xf32>
    %cst_11 = arith.constant dense<0.000000e+00> : vector<2x128xf32>
    %23 = vector.multi_reduction <add>, %22, %cst_11 [1] : vector<2x8x128xf32> to vector<2x128xf32>
    %c384 = arith.constant 384 : index
    %c0_12 = arith.constant 0 : index
    %24 = vector.load %arg2[%c384, %c0_12] : memref<640x128xbf16, #tpu.memory_space<vmem>>, vector<128x128xbf16>
    %25 = arith.truncf %23 : vector<2x128xf32> to vector<2x128xbf16>
    %cst_13 = arith.constant dense<0.000000e+00> : vector<2x128xf32>
    %26 = tpu.matmul %25, %24, %cst_13 {dimension_numbers = #tpu.dot_dimension_numbers<[1], [0], [0], [1], [0, 0, 1, 1], [], []>} : vector<2x128xbf16>, vector<128x128xbf16>, vector<2x128xf32> -> vector<2x128xf32>
    %c3 = arith.constant 3 : index
    %c0_14 = arith.constant 0 : index
    %27 = vector.load %arg3[%c3, %c0_14] : memref<5x128xf32, #tpu.memory_space<vmem>>, vector<1x128xf32>
    %28 = vector.broadcast %27 : vector<1x128xf32> to vector<2x128xf32>
    %29 = arith.addf %26, %28 : vector<2x128xf32>
    %30 = math.tanh %29 : vector<2x128xf32>
    %c512 = arith.constant 512 : index
    %c0_15 = arith.constant 0 : index
    %31 = vector.load %arg2[%c512, %c0_15] : memref<640x128xbf16, #tpu.memory_space<vmem>>, vector<128x128xbf16>
    %32 = arith.truncf %30 : vector<2x128xf32> to vector<2x128xbf16>
    %cst_16 = arith.constant dense<0.000000e+00> : vector<2x128xf32>
    %33 = tpu.matmul %32, %31, %cst_16 {dimension_numbers = #tpu.dot_dimension_numbers<[1], [0], [0], [1], [0, 0, 1, 1], [], []>} : vector<2x128xbf16>, vector<128x128xbf16>, vector<2x128xf32> -> vector<2x128xf32>
    %c4 = arith.constant 4 : index
    %c0_17 = arith.constant 0 : index
    %34 = vector.load %arg3[%c4, %c0_17] : memref<5x128xf32, #tpu.memory_space<vmem>>, vector<1x128xf32>
    %35 = vector.broadcast %34 : vector<1x128xf32> to vector<2x128xf32>
    %36 = arith.addf %33, %35 : vector<2x128xf32>
    %c0_18 = arith.constant 0 : index
    %c0_19 = arith.constant 0 : index
    %37 = vector.load %arg4[%c0_18, %c0_19] : memref<2x128xf32, #tpu.memory_space<vmem>>, vector<2x128xf32>
    tpu.vector_store %arg4[%c0_18, %c0_19], %36 {strides = array<i32>} : memref<2x128xf32, #tpu.memory_space<vmem>>, vector<2x128xf32>,
    return
  }
  func.func @transform_0(%arg0: i32) -> (i32, i32) {
    %c0_i32 = arith.constant 0 : i32
    %c0_i32_0 = arith.constant 0 : i32
    return %arg0, %c0_i32 : i32, i32
  }
  func.func @transform_1(%arg0: i32) -> (i32, i32) {
    %c0_i32 = arith.constant 0 : i32
    %c0_i32_0 = arith.constant 0 : i32
    %c0_i32_1 = arith.constant 0 : i32
    return %c0_i32, %c0_i32_0 : i32, i32
  }
  func.func @transform_2(%arg0: i32) -> (i32, i32) {
    %c0_i32 = arith.constant 0 : i32
    %c0_i32_0 = arith.constant 0 : i32
    %c0_i32_1 = arith.constant 0 : i32
    return %c0_i32, %c0_i32_0 : i32, i32
  }
  func.func @transform_3(%arg0: i32) -> (i32, i32) {
    %c0_i32 = arith.constant 0 : i32
    %c0_i32_0 = arith.constant 0 : i32
    return %arg0, %c0_i32 : i32, i32
  }
}

module attributes {stable_mosaic.version = 11 : i64} {
  func.func @kernel(%arg0: i32, %arg1: memref<16x3xf32, #tpu.memory_space<vmem>>, %arg2: memref<640x128xbf16, #tpu.memory_space<vmem>>, %arg3: memref<5x128xf32, #tpu.memory_space<vmem>>, %arg4: memref<2x128xf32, #tpu.memory_space<vmem>>) attributes {dimension_semantics = [#tpu.dimension_semantics<parallel>], iteration_bounds = array<i64: 1>, scalar_prefetch = 0 : i64, scratch_operands = 0 : i64, tpu.core_type = #tpu.core_type<tc>, window_params = [{transform_indices = @transform_0, window_bounds = array<i64: 16, 3>}, {pipeline_mode = #tpu.pipeline_mode<synchronous>, transform_indices = @transform_1, window_bounds = array<i64: 640, 128>}, {pipeline_mode = #tpu.pipeline_mode<synchronous>, transform_indices = @transform_2, window_bounds = array<i64: 5, 128>}, {transform_indices = @transform_3, window_bounds = array<i64: 2, 128>}]} {
    %c0 = arith.constant 0 : index
    %c0_0 = arith.constant 0 : index
    %0 = vector.load %arg2[%c0, %c0_0] : memref<640x128xbf16, #tpu.memory_space<vmem>>, vector<3x128xbf16>
    %1 = arith.extf %0 : vector<3x128xbf16> to vector<3x128xf32>
    %c0_1 = arith.constant 0 : index
    %c0_2 = arith.constant 0 : index
    %2 = vector.load %arg1[%c0_1, %c0_2] : memref<16x3xf32, #tpu.memory_space<vmem>>, vector<16x3xf32>
    %cst = arith.constant dense<0.000000e+00> : vector<16x128xf32>
    %3 = tpu.matmul %2, %1, %cst {dimension_numbers = #tpu.dot_dimension_numbers<[1], [0], [0], [1], [0, 0, 1, 1], [], []>} : vector<16x3xf32>, vector<3x128xf32>, vector<16x128xf32> -> vector<16x128xf32>
    %c0_3 = arith.constant 0 : index
    %c0_4 = arith.constant 0 : index
    %4 = vector.load %arg3[%c0_3, %c0_4] : memref<5x128xf32, #tpu.memory_space<vmem>>, vector<1x128xf32>
    %5 = vector.broadcast %4 : vector<1x128xf32> to vector<16x128xf32>
    %6 = arith.addf %3, %5 : vector<16x128xf32>
    %7 = math.tanh %6 : vector<16x128xf32>
    %c128 = arith.constant 128 : index
    %c0_5 = arith.constant 0 : index
    %8 = vector.load %arg2[%c128, %c0_5] : memref<640x128xbf16, #tpu.memory_space<vmem>>, vector<128x128xbf16>
    %9 = arith.truncf %7 : vector<16x128xf32> to vector<16x128xbf16>
    %cst_6 = arith.constant dense<0.000000e+00> : vector<16x128xf32>
    %10 = tpu.matmul %9, %8, %cst_6 {dimension_numbers = #tpu.dot_dimension_numbers<[1], [0], [0], [1], [0, 0, 1, 1], [], []>} : vector<16x128xbf16>, vector<128x128xbf16>, vector<16x128xf32> -> vector<16x128xf32>
    %c1 = arith.constant 1 : index
    %c0_7 = arith.constant 0 : index
    %11 = vector.load %arg3[%c1, %c0_7] : memref<5x128xf32, #tpu.memory_space<vmem>>, vector<1x128xf32>
    %12 = vector.broadcast %11 : vector<1x128xf32> to vector<16x128xf32>
    %13 = arith.addf %10, %12 : vector<16x128xf32>
    %14 = math.tanh %13 : vector<16x128xf32>
    %c256 = arith.constant 256 : index
    %c0_8 = arith.constant 0 : index
    %15 = vector.load %arg2[%c256, %c0_8] : memref<640x128xbf16, #tpu.memory_space<vmem>>, vector<128x128xbf16>
    %16 = arith.truncf %14 : vector<16x128xf32> to vector<16x128xbf16>
    %cst_9 = arith.constant dense<0.000000e+00> : vector<16x128xf32>
    %17 = tpu.matmul %16, %15, %cst_9 {dimension_numbers = #tpu.dot_dimension_numbers<[1], [0], [0], [1], [0, 0, 1, 1], [], []>} : vector<16x128xbf16>, vector<128x128xbf16>, vector<16x128xf32> -> vector<16x128xf32>
    %c2 = arith.constant 2 : index
    %c0_10 = arith.constant 0 : index
    %18 = vector.load %arg3[%c2, %c0_10] : memref<5x128xf32, #tpu.memory_space<vmem>>, vector<1x128xf32>
    %19 = vector.broadcast %18 : vector<1x128xf32> to vector<16x128xf32>
    %20 = arith.addf %17, %19 : vector<16x128xf32>
    %21 = math.tanh %20 : vector<16x128xf32>
    %22 = vector.shape_cast %21 : vector<16x128xf32> to vector<2x8x128xf32>
    %cst_11 = arith.constant dense<0.000000e+00> : vector<2x128xf32>
    %23 = vector.multi_reduction <add>, %22, %cst_11 [1] : vector<2x8x128xf32> to vector<2x128xf32>
    %c384 = arith.constant 384 : index
    %c0_12 = arith.constant 0 : index
    %24 = vector.load %arg2[%c384, %c0_12] : memref<640x128xbf16, #tpu.memory_space<vmem>>, vector<128x128xbf16>
    %25 = arith.truncf %23 : vector<2x128xf32> to vector<2x128xbf16>
    %cst_13 = arith.constant dense<0.000000e+00> : vector<2x128xf32>
    %26 = tpu.matmul %25, %24, %cst_13 {dimension_numbers = #tpu.dot_dimension_numbers<[1], [0], [0], [1], [0, 0, 1, 1], [], []>} : vector<2x128xbf16>, vector<128x128xbf16>, vector<2x128xf32> -> vector<2x128xf32>
    %c3 = arith.constant 3 : index
    %c0_14 = arith.constant 0 : index
    %27 = vector.load %arg3[%c3, %c0_14] : memref<5x128xf32, #tpu.memory_space<vmem>>, vector<1x128xf32>
    %28 = vector.broadcast %27 : vector<1x128xf32> to vector<2x128xf32>
    %29 = arith.addf %26, %28 : vector<2x128xf32>
    %30 = math.tanh %29 : vector<2x128xf32>
    %c512 = arith.constant 512 : index
    %c0_15 = arith.constant 0 : index
    %31 = vector.load %arg2[%c512, %c0_15] : memref<640x128xbf16, #tpu.memory_space<vmem>>, vector<128x128xbf16>
    %32 = arith.truncf %30 : vector<2x128xf32> to vector<2x128xbf16>
    %cst_16 = arith.constant dense<0.000000e+00> : vector<2x128xf32>
    %33 = tpu.matmul %32, %31, %cst_16 {dimension_numbers = #tpu.dot_dimension_numbers<[1], [0], [0], [1], [0, 0, 1, 1], [], []>} : vector<2x128xbf16>, vector<128x128xbf16>, vector<2x128xf32> -> vector<2x128xf32>
    %c4 = arith.constant 4 : index
    %c0_17 = arith.constant 0 : index
    %34 = vector.load %arg3[%c4, %c0_17] : memref<5x128xf32, #tpu.memory_space<vmem>>, vector<1x128xf32>
    %35 = vector.broadcast %34 : vector<1x128xf32> to vector<2x128xf32>
    %36 = arith.addf %33, %35 : vector<2x128xf32>
    %c0_18 = arith.constant 0 : index
    %c0_19 = arith.constant 0 : index
    %37 = vector.load %arg4[%c0_18, %c0_19] : memref<2x128xf32, #tpu.memory_space<vmem>>, vector<2x128xf32>
    tpu.vector_store %arg4[%c0_18, %c0_19], %36 {strides = array<i32>} : memref<2x128xf32, #tpu.memory_space<vmem>>, vector<2x128xf32>,
    return
  }
  func.func @transform_0(%arg0: i32) -> (i32, i32) {
    %c0_i32 = arith.constant 0 : i32
    %c0_i32_0 = arith.constant 0 : i32
    return %arg0, %c0_i32 : i32, i32
  }
  func.func @transform_1(%arg0: i32) -> (i32, i32) {
    %c0_i32 = arith.constant 0 : i32
    %c0_i32_0 = arith.constant 0 : i32
    %c0_i32_1 = arith.constant 0 : i32
    return %c0_i32, %c0_i32_0 : i32, i32
  }
  func.func @transform_2(%arg0: i32) -> (i32, i32) {
    %c0_i32 = arith.constant 0 : i32
    %c0_i32_0 = arith.constant 0 : i32
    %c0_i32_1 = arith.constant 0 : i32
    return %c0_i32, %c0_i32_0 : i32, i32
  }
  func.func @transform_3(%arg0: i32) -> (i32, i32) {
    %c0_i32 = arith.constant 0 : i32
    %c0_i32_0 = arith.constant 0 : i32
    return %arg0, %c0_i32 : i32, i32
  }
}

</mosaic_0001>

<llo_original>
// kernel: tpu_custom_call.1
$region0: #{tpu_custom_call.1}
  #allocation0 [shape = 'u32[]', space=smem, size = 0x4, offset = 0x4, fixed_abs, tag = 'smem constant byte address 0x4 - core index']
  #allocation1 [shape = 'u32[144,128]{1,0:T(1,128)}', space=vmem, size = 0x12000, scoped, tag = 'internal scratch']
  %s0 = inlined_call_operand.vmem [shape: f32[16,3], index: 0, kind: input, shape index: {}]
  %s1 = inlined_call_operand.hbm [shape: bf16[640,128], index: 1, kind: input, shape index: {}]
  %s2 = inlined_call_operand.vmem [shape: f32[5,128], index: 2, kind: input, shape index: {}]
  %s3 = inlined_call_operand.hbm [shape: f32[2,128], index: 3, kind: output, shape index: {}]
  %s4 = sld [smem:[#allocation0]]
  $region26: #{tpu_custom_call.1} parent=0
    _
  %s6 = ssub.s32 1, %s4
  %s7 = scalar_select 0, %s6, %s4
  $region1: #{tpu_custom_call.1} parent=0
    #allocation2 [shape = 'u8[163840]{0}', space=vmem, size = 0x28000, scoped, tag = 'input window, operand 1, single buffered']
    #allocation3 [shape = 's32[1]{0}', space=sflag, size = 0x4, scoped, tag = 'scoped memory for tpu_custom_call.1']
    #allocation4 [shape = 's32[1]{0}', space=sflag, size = 0x4, scoped, tag = 'scoped memory for tpu_custom_call.1']
    #allocation5 [shape = 'u8[1024]{0}', space=vmem, size = 0x400, scoped, tag = 'output window, operand 0, single buffered']
    %8 = vsyncpa [#allocation3], 0
    %9 = vsyncpa [#allocation4], 0
    // Predicated region
    $region2: #{tpu_custom_call.1} parent=1 // pred_check
      _
    $region3: #{tpu_custom_call.1} parent=1 // pred_check_branch
      %11 = sbr.rel (0) target = $region5
    $region4: #{tpu_custom_call.1} parent=1 // pred_region
      _
    $region5: #{tpu_custom_call.1} parent=1 // pred_fallthru
      _
    // Predicated region
    $region6: #{tpu_custom_call.1} parent=1 // pred_check
      _
    $region7: #{tpu_custom_call.1} parent=1 // pred_check_branch
      %13 = sbr.rel (0) target = $region9
    $region8: #{tpu_custom_call.1} parent=1 // pred_region
      %s15 = ssub.s32 5120, 5120
      %16 = vsyncadd [#allocation3], %s15
      %s17 = sshll.u32 [#allocation2], 4
      %s18 = int_to_ptr.vmem [resolvable:$true] %s17
      %23 = dma.hbm_to_vmem [thread:$0]  %s1, 5120, %s18, [#allocation3], 64, 64, 4
    $region9: #{tpu_custom_call.1} parent=1 // pred_fallthru
      _
    // Predicated region
    $region10: #{tpu_custom_call.1} parent=1 // pred_check
      _
    $region11: #{tpu_custom_call.1} parent=1 // pred_check_branch
      %25 = sbr.rel (0) target = $region13
    $region12: #{tpu_custom_call.1} parent=1 // pred_region
      _
    $region13: #{tpu_custom_call.1} parent=1 // pred_fallthru
      _
    // Predicated region
    $region14: #{tpu_custom_call.1} parent=1 // pred_check
      _
    $region15: #{tpu_custom_call.1} parent=1 // pred_check_branch
      %27 = sbr.rel (0) target = $region17
    $region16: #{tpu_custom_call.1} parent=1 // pred_region
      %28 = dma.done [#allocation3], 5120
    $region17: #{tpu_custom_call.1} parent=1 // pred_fallthru
      _
    %v30 = vld [vmem:[#allocation2] sm:$0x3]
    %v31 = vunpack.c.l.bf16 %v30
    %v32 = vld [vmem:[%s0] sm:$0xff]
    %v33 = vld [vmem:[%s0 + $0x8] sm:$0xff]
    %v34 = vld [vmem:[%s2] sm:$0x1]
    %v35 = vlaneseq
    %v36 = vshrl.u32 %v35, 7
    %v37 = vsub.s32 0, %v36
    %v38 = vrot.slane %v34, %v37
    %vm39 = vcmask 23552
    %v41 = vsel %vm39, %v32, 0
    %v44 = vsel %vm39, %v33, 0
    %vm46 = vcmask 1042432
    %v48 = vsel %vm46, %v31, 0
    %50 = vmatprep.subr.mxu0 0.0
    %51 = vmatpush1.msra.mxu0 %v48
    %52 = vmatprep.subr.mxu0 0.0
    %53 = vmatpush1.msra.mxu0 0.0
    %54 = vmatprep.subr.mxu0 0.0
    %55 = vmatpush1.msra.mxu0 0.0
    %56 = vmatprep.subr.mxu0 0.0
    %57 = vmatpush1.msra.mxu0 0.0
    %58 = vmatprep.subr.mxu0 0.0
    %59 = vmatpush1.msra.mxu0 0.0
    %60 = vmatprep.subr.mxu0 0.0
    %61 = vmatpush1.msra.mxu0 0.0
    %62 = vmatprep.subr.mxu0 0.0
    %63 = vmatpush1.msra.mxu0 0.0
    %64 = vmatprep.subr.mxu0 0.0
    %65 = vmatpush1.msra.mxu0 0.0
    %66 = vmatprep.subr.mxu0 0.0
    %67 = vmatpush1.msra.mxu0 0.0
    %68 = vmatprep.subr.mxu0 0.0
    %69 = vmatpush1.msra.mxu0 0.0
    %70 = vmatprep.subr.mxu0 0.0
    %71 = vmatpush1.msra.mxu0 0.0
    %72 = vmatprep.subr.mxu0 0.0
    %73 = vmatpush1.msra.mxu0 0.0
    %74 = vmatprep.subr.mxu0 0.0
    %75 = vmatpush1.msra.mxu0 0.0
    %76 = vmatprep.subr.mxu0 0.0
    %77 = vmatpush1.msra.mxu0 0.0
    %78 = vmatprep.subr.mxu0 0.0
    %79 = vmatpush1.msra.mxu0 0.0
    %80 = vmatprep.subr.mxu0 0.0
    %81 = vmatpush1.msra.mxu0 0.0
    %82 = vmatprep.subr.mxu0 0.0
    %83 = vmatpush1.msra.mxu0 0.0
    %84 = vmatprep.subr.mxu0 0.0
    %85 = vmatpush1.msra.mxu0 0.0
    %86 = vmatprep.subr.mxu0 0.0
    %87 = vmatpush1.msra.mxu0 0.0
    %88 = vmatprep.subr.mxu0 0.0
    %89 = vmatpush1.msra.mxu0 0.0
    %90 = vmatprep.subr.mxu0 0.0
    %91 = vmatpush1.msra.mxu0 0.0
    %92 = vmatprep.subr.mxu0 0.0
    %93 = vmatpush1.msra.mxu0 0.0
    %94 = vmatprep.subr.mxu0 0.0
    %95 = vmatpush1.msra.mxu0 0.0
    %96 = vmatprep.subr.mxu0 0.0
    %97 = vmatpush1.msra.mxu0 0.0
    %98 = vmatprep.subr.mxu0 0.0
    %99 = vmatpush1.msra.mxu0 0.0
    %100 = vmatprep.subr.mxu0 0.0
    %101 = vmatpush1.msra.mxu0 0.0
    %102 = vmatprep.subr.mxu0 0.0
    %103 = vmatpush1.msra.mxu0 0.0
    %104 = vmatprep.subr.mxu0 0.0
    %105 = vmatpush1.msra.mxu0 0.0
    %106 = vmatprep.subr.mxu0 0.0
    %107 = vmatpush1.msra.mxu0 0.0
    %108 = vmatprep.subr.mxu0 0.0
    %109 = vmatpush1.msra.mxu0 0.0
    %110 = vmatprep.subr.mxu0 0.0
    %111 = vmatpush1.msra.mxu0 0.0
    %112 = vmatprep.subr.mxu0 0.0
    %113 = vmatpush1.msra.mxu0 0.0
    %114 = vmatprep.mubr.f32.mxu0 0.0
    %115 = vmatmul.mubr.f32.gmra.mrb[0].mxu0 %v41
    %v116 = vpop.f32.mrb[0].mxu0
    %v117 = vadd.f32 %v38, %v116
    %v118 = vpop.f32.mrb[0].mxu0
    %119 = vmatprep.mubr.f32.mxu0 0.0
    %120 = vmatmul.mubr.f32.gmra.mrb[0].mxu0 %v44
    %v121 = vpop.f32.mrb[0].mxu0
    %v122 = vadd.f32 %v38, %v121
    %v123 = vpop.f32.mrb[0].mxu0
    %124 = vdwg.mxu0
    %v125 = vtanh.pop %v117
    %v126 = vtanh.pop %v122
    %v127 = vld [vmem:[#allocation2 + $0x40] sm:$0xf]
    %v128 = vld [vmem:[#allocation2 + $0x44] sm:$0xf]
    %v129 = vld [vmem:[#allocation2 + $0x48] sm:$0xf]
    %v130 = vld [vmem:[#allocation2 + $0x4c] sm:$0xf]
    %v131 = vld [vmem:[#allocation2 + $0x50] sm:$0xf]
    %v132 = vld [vmem:[#allocation2 + $0x54] sm:$0xf]
    %v133 = vld [vmem:[#allocation2 + $0x58] sm:$0xf]
    %v134 = vld [vmem:[#allocation2 + $0x5c] sm:$0xf]
    %v135 = vld [vmem:[#allocation2 + $0x60] sm:$0xf]
    %v136 = vld [vmem:[#allocation2 + $0x64] sm:$0xf]
    %v137 = vld [vmem:[#allocation2 + $0x68] sm:$0xf]
    %v138 = vld [vmem:[#allocation2 + $0x6c] sm:$0xf]
    %v139 = vld [vmem:[#allocation2 + $0x70] sm:$0xf]
    %v140 = vld [vmem:[#allocation2 + $0x74] sm:$0xf]
    %v141 = vld [vmem:[#allocation2 + $0x78] sm:$0xf]
    %v142 = vld [vmem:[#allocation2 + $0x7c] sm:$0xf]
    %v143 = vpack.c.bf16 %v126, %v125
    %v144 = vld [vmem:[%s2 + $0x1] sm:$0x1]
    %v145 = vlaneseq
    %v146 = vshrl.u32 %v145, 7
    %v147 = vsub.s32 0, %v146
    %v148 = vrot.slane %v144, %v147
    %v165 = vunpack.c.l.b16 %v127
    %v166 = vunpack.c.l.b16 %v128
    %v167 = vunpack.c.l.b16 %v129
    %v168 = vunpack.c.l.b16 %v130
    %v169 = vunpack.c.l.b16 %v131
    %v170 = vunpack.c.l.b16 %v132
    %v171 = vunpack.c.l.b16 %v133
    %v172 = vunpack.c.l.b16 %v134
    %v173 = vunpack.c.l.b16 %v135
    %v174 = vunpack.c.l.b16 %v136
    %v175 = vunpack.c.l.b16 %v137
    %v176 = vunpack.c.l.b16 %v138
    %v177 = vunpack.c.l.b16 %v139
    %v178 = vunpack.c.l.b16 %v140
    %v179 = vunpack.c.l.b16 %v141
    %v180 = vunpack.c.l.b16 %v142
    %v181 = vpack.c.b16 %v166, %v165
    %v182 = vpack.c.b16 %v168, %v167
    %v183 = vpack.c.b16 %v170, %v169
    %v184 = vpack.c.b16 %v172, %v171
    %v185 = vpack.c.b16 %v174, %v173
    %v186 = vpack.c.b16 %v176, %v175
    %v187 = vpack.c.b16 %v178, %v177
    %v188 = vpack.c.b16 %v180, %v179
    %197 = vmatprep.subr.bf16.mxu0 0
    %198 = vmatpush1.bf16.msra.mxu0 %v181
    %199 = vmatprep.subr.bf16.mxu0 0
    %200 = vmatpush1.bf16.msra.mxu0 %v182
    %201 = vmatprep.subr.bf16.mxu0 0
    %202 = vmatpush1.bf16.msra.mxu0 %v183
    %203 = vmatprep.subr.bf16.mxu0 0
    %204 = vmatpush1.bf16.msra.mxu0 %v184
    %205 = vmatprep.subr.bf16.mxu0 0
    %206 = vmatpush1.bf16.msra.mxu0 %v185
    %207 = vmatprep.subr.bf16.mxu0 0
    %208 = vmatpush1.bf16.msra.mxu0 %v186
    %209 = vmatprep.subr.bf16.mxu0 0
    %210 = vmatpush1.bf16.msra.mxu0 %v187
    %211 = vmatprep.subr.bf16.mxu0 0
    %212 = vmatpush1.bf16.msra.mxu0 %v188
    %213 = vmatprep.subr.bf16.mxu0 0
    %214 = vmatpush1.bf16.msra.mxu0 0
    %215 = vmatprep.subr.bf16.mxu0 0
    %216 = vmatpush1.bf16.msra.mxu0 0
    %217 = vmatprep.subr.bf16.mxu0 0
    %218 = vmatpush1.bf16.msra.mxu0 0
    %219 = vmatprep.subr.bf16.mxu0 0
    %220 = vmatpush1.bf16.msra.mxu0 0
    %221 = vmatprep.subr.bf16.mxu0 0
    %222 = vmatpush1.bf16.msra.mxu0 0
    %223 = vmatprep.subr.bf16.mxu0 0
    %224 = vmatpush1.bf16.msra.mxu0 0
    %225 = vmatprep.subr.bf16.mxu0 0
    %226 = vmatpush1.bf16.msra.mxu0 0
    %227 = vmatprep.subr.bf16.mxu0 0
    %228 = vmatpush1.bf16.msra.mxu0 0
    %229 = vmatprep.mubr.bf16.mxu0 0
    %230 = vmatmul.mubr.bf16.gmra.mrb[0].mxu0 %v143
    %v231 = vpop.f32.mrb[0].mxu0
    %v232 = vadd.f32 %v148, %v231
    %v233 = vpop.f32.mrb[0].mxu0
    %v234 = vpop.f32.mrb[0].mxu0
    %v235 = vadd.f32 %v148, %v234
    %v236 = vpop.f32.mrb[0].mxu0
    %237 = vdwg.mxu0
    %v238 = vtanh.pop %v232
    %v239 = vtanh.pop %v235
    %v240 = vld [vmem:[#allocation2 + $0x80] sm:$0xf]
    %v241 = vld [vmem:[#allocation2 + $0x84] sm:$0xf]
    %v242 = vld [vmem:[#allocation2 + $0x88] sm:$0xf]
    %v243 = vld [vmem:[#allocation2 + $0x8c] sm:$0xf]
    %v244 = vld [vmem:[#allocation2 + $0x90] sm:$0xf]
    %v245 = vld [vmem:[#allocation2 + $0x94] sm:$0xf]
    %v246 = vld [vmem:[#allocation2 + $0x98] sm:$0xf]
    %v247 = vld [vmem:[#allocation2 + $0x9c] sm:$0xf]
    %v248 = vld [vmem:[#allocation2 + $0xa0] sm:$0xf]
    %v249 = vld [vmem:[#allocation2 + $0xa4] sm:$0xf]
    %v250 = vld [vmem:[#allocation2 + $0xa8] sm:$0xf]
    %v251 = vld [vmem:[#allocation2 + $0xac] sm:$0xf]
    %v252 = vld [vmem:[#allocation2 + $0xb0] sm:$0xf]
    %v253 = vld [vmem:[#allocation2 + $0xb4] sm:$0xf]
    %v254 = vld [vmem:[#allocation2 + $0xb8] sm:$0xf]
    %v255 = vld [vmem:[#allocation2 + $0xbc] sm:$0xf]
    %v256 = vpack.c.bf16 %v239, %v238
    %v257 = vld [vmem:[%s2 + $0x2] sm:$0x1]
    %v258 = vlaneseq
    %v259 = vshrl.u32 %v258, 7
    %v260 = vsub.s32 0, %v259
    %v261 = vrot.slane %v257, %v260
    %v278 = vunpack.c.l.b16 %v240
    %v279 = vunpack.c.l.b16 %v241
    %v280 = vunpack.c.l.b16 %v242
    %v281 = vunpack.c.l.b16 %v243
    %v282 = vunpack.c.l.b16 %v244
    %v283 = vunpack.c.l.b16 %v245
    %v284 = vunpack.c.l.b16 %v246
    %v285 = vunpack.c.l.b16 %v247
    %v286 = vunpack.c.l.b16 %v248
    %v287 = vunpack.c.l.b16 %v249
    %v288 = vunpack.c.l.b16 %v250
    %v289 = vunpack.c.l.b16 %v251
    %v290 = vunpack.c.l.b16 %v252
    %v291 = vunpack.c.l.b16 %v253
    %v292 = vunpack.c.l.b16 %v254
    %v293 = vunpack.c.l.b16 %v255
    %v294 = vpack.c.b16 %v279, %v278
    %v295 = vpack.c.b16 %v281, %v280
    %v296 = vpack.c.b16 %v283, %v282
    %v297 = vpack.c.b16 %v285, %v284
    %v298 = vpack.c.b16 %v287, %v286
    %v299 = vpack.c.b16 %v289, %v288
    %v300 = vpack.c.b16 %v291, %v290
    %v301 = vpack.c.b16 %v293, %v292
    %310 = vmatprep.subr.bf16.mxu0 0
    %311 = vmatpush1.bf16.msra.mxu0 %v294
    %312 = vmatprep.subr.bf16.mxu0 0
    %313 = vmatpush1.bf16.msra.mxu0 %v295
    %314 = vmatprep.subr.bf16.mxu0 0
    %315 = vmatpush1.bf16.msra.mxu0 %v296
    %316 = vmatprep.subr.bf16.mxu0 0
    %317 = vmatpush1.bf16.msra.mxu0 %v297
    %318 = vmatprep.subr.bf16.mxu0 0
    %319 = vmatpush1.bf16.msra.mxu0 %v298
    %320 = vmatprep.subr.bf16.mxu0 0
    %321 = vmatpush1.bf16.msra.mxu0 %v299
    %322 = vmatprep.subr.bf16.mxu0 0
    %323 = vmatpush1.bf16.msra.mxu0 %v300
    %324 = vmatprep.subr.bf16.mxu0 0
    %325 = vmatpush1.bf16.msra.mxu0 %v301
    %326 = vmatprep.subr.bf16.mxu0 0
    %327 = vmatpush1.bf16.msra.mxu0 0
    %328 = vmatprep.subr.bf16.mxu0 0
    %329 = vmatpush1.bf16.msra.mxu0 0
    %330 = vmatprep.subr.bf16.mxu0 0
    %331 = vmatpush1.bf16.msra.mxu0 0
    %332 = vmatprep.subr.bf16.mxu0 0
    %333 = vmatpush1.bf16.msra.mxu0 0
    %334 = vmatprep.subr.bf16.mxu0 0
    %335 = vmatpush1.bf16.msra.mxu0 0
    %336 = vmatprep.subr.bf16.mxu0 0
    %337 = vmatpush1.bf16.msra.mxu0 0
    %338 = vmatprep.subr.bf16.mxu0 0
    %339 = vmatpush1.bf16.msra.mxu0 0
    %340 = vmatprep.subr.bf16.mxu0 0
    %341 = vmatpush1.bf16.msra.mxu0 0
    %342 = vmatprep.mubr.bf16.mxu0 0
    %343 = vmatmul.mubr.bf16.gmra.mrb[0].mxu0 %v256
    %v344 = vpop.f32.mrb[0].mxu0
    %v345 = vadd.f32 %v261, %v344
    %v346 = vpop.f32.mrb[0].mxu0
    %v347 = vpop.f32.mrb[0].mxu0
    %v348 = vadd.f32 %v261, %v347
    %v349 = vpop.f32.mrb[0].mxu0
    %350 = vdwg.mxu0
    %v351 = vtanh.pop %v345
    %v352 = vtanh.pop %v348
    %v353 = vrot.slane %v351, 4
    %v354 = vadd.f32 %v351, %v353
    %v355 = vrot.slane %v354, 2
    %v356 = vadd.f32 %v354, %v355
    %v357 = vrot.slane %v356, 1
    %v358 = vadd.f32 %v356, %v357
    %v359 = vrot.slane %v352, 4
    %v360 = vadd.f32 %v352, %v359
    %v361 = vrot.slane %v360, 2
    %v362 = vadd.f32 %v360, %v361
    %v363 = vrot.slane %v362, 1
    %v364 = vadd.f32 %v362, %v363
    %v365 = vld [vmem:[#allocation2 + $0xc0] sm:$0xf]
    %v366 = vld [vmem:[#allocation2 + $0xc4] sm:$0xf]
    %v367 = vld [vmem:[#allocation2 + $0xc8] sm:$0xf]
    %v368 = vld [vmem:[#allocation2 + $0xcc] sm:$0xf]
    %v369 = vld [vmem:[#allocation2 + $0xd0] sm:$0xf]
    %v370 = vld [vmem:[#allocation2 + $0xd4] sm:$0xf]
    %v371 = vld [vmem:[#allocation2 + $0xd8] sm:$0xf]
    %v372 = vld [vmem:[#allocation2 + $0xdc] sm:$0xf]
    %v373 = vld [vmem:[#allocation2 + $0xe0] sm:$0xf]
    %v374 = vld [vmem:[#allocation2 + $0xe4] sm:$0xf]
    %v375 = vld [vmem:[#allocation2 + $0xe8] sm:$0xf]
    %v376 = vld [vmem:[#allocation2 + $0xec] sm:$0xf]
    %v377 = vld [vmem:[#allocation2 + $0xf0] sm:$0xf]
    %v378 = vld [vmem:[#allocation2 + $0xf4] sm:$0xf]
    %v379 = vld [vmem:[#allocation2 + $0xf8] sm:$0xf]
    %v380 = vld [vmem:[#allocation2 + $0xfc] sm:$0xf]
    %v381 = vpack.c.bf16 %v358, %v358
    %v382 = vpack.c.bf16 %v364, %v364
    %v383 = vld [vmem:[%s2 + $0x3] sm:$0x1]
    %v384 = vlaneseq
    %v385 = vshrl.u32 %v384, 7
    %v386 = vsub.s32 0, %v385
    %v387 = vrot.slane %v383, %v386
    %v390 = vunpack.c.l.b16 %v381
    %v391 = vunpack.c.l.b16 %v382
    %vm392 = vcmask 1041409
    %v393 = vsel %vm392, %v391, %v390
    %v394 = vpack.c.b16 %v393, %v393
    %v412 = vunpack.c.l.b16 %v365
    %v413 = vunpack.c.l.b16 %v366
    %v414 = vunpack.c.l.b16 %v367
    %v415 = vunpack.c.l.b16 %v368
    %v416 = vunpack.c.l.b16 %v369
    %v417 = vunpack.c.l.b16 %v370
    %v418 = vunpack.c.l.b16 %v371
    %v419 = vunpack.c.l.b16 %v372
    %v420 = vunpack.c.l.b16 %v373
    %v421 = vunpack.c.l.b16 %v374
    %v422 = vunpack.c.l.b16 %v375
    %v423 = vunpack.c.l.b16 %v376
    %v424 = vunpack.c.l.b16 %v377
    %v425 = vunpack.c.l.b16 %v378
    %v426 = vunpack.c.l.b16 %v379
    %v427 = vunpack.c.l.b16 %v380
    %v428 = vpack.c.b16 %v413, %v412
    %v429 = vpack.c.b16 %v415, %v414
    %v430 = vpack.c.b16 %v417, %v416
    %v431 = vpack.c.b16 %v419, %v418
    %v432 = vpack.c.b16 %v421, %v420
    %v433 = vpack.c.b16 %v423, %v422
    %v434 = vpack.c.b16 %v425, %v424
    %v435 = vpack.c.b16 %v427, %v426
    %444 = vmatprep.subr.bf16.mxu0 0
    %445 = vmatpush1.bf16.msra.mxu0 %v428
    %446 = vmatprep.subr.bf16.mxu0 0
    %447 = vmatpush1.bf16.msra.mxu0 %v429
    %448 = vmatprep.subr.bf16.mxu0 0
    %449 = vmatpush1.bf16.msra.mxu0 %v430
    %450 = vmatprep.subr.bf16.mxu0 0
    %451 = vmatpush1.bf16.msra.mxu0 %v431
    %452 = vmatprep.subr.bf16.mxu0 0
    %453 = vmatpush1.bf16.msra.mxu0 %v432
    %454 = vmatprep.subr.bf16.mxu0 0
    %455 = vmatpush1.bf16.msra.mxu0 %v433
    %456 = vmatprep.subr.bf16.mxu0 0
    %457 = vmatpush1.bf16.msra.mxu0 %v434
    %458 = vmatprep.subr.bf16.mxu0 0
    %459 = vmatpush1.bf16.msra.mxu0 %v435
    %460 = vmatprep.subr.bf16.mxu0 0
    %461 = vmatpush1.bf16.msra.mxu0 0
    %462 = vmatprep.subr.bf16.mxu0 0
    %463 = vmatpush1.bf16.msra.mxu0 0
    %464 = vmatprep.subr.bf16.mxu0 0
    %465 = vmatpush1.bf16.msra.mxu0 0
    %466 = vmatprep.subr.bf16.mxu0 0
    %467 = vmatpush1.bf16.msra.mxu0 0
    %468 = vmatprep.subr.bf16.mxu0 0
    %469 = vmatpush1.bf16.msra.mxu0 0
    %470 = vmatprep.subr.bf16.mxu0 0
    %471 = vmatpush1.bf16.msra.mxu0 0
    %472 = vmatprep.subr.bf16.mxu0 0
    %473 = vmatpush1.bf16.msra.mxu0 0
    %474 = vmatprep.subr.bf16.mxu0 0
    %475 = vmatpush1.bf16.msra.mxu0 0
    %476 = vmatprep.mubr.bf16.mxu0 0
    %477 = vmatmul.mubr.bf16.gmra.mrb[0].mxu0 %v394
    %v478 = vpop.f32.mrb[0].mxu0
    %v479 = vadd.f32 %v387, %v478
    %v480 = vpop.f32.mrb[0].mxu0
    %v481 = vpop.f32.mrb[0].mxu0
    %v482 = vpop.f32.mrb[0].mxu0
    %483 = vdwg.mxu0
    %v484 = vtanh.pop %v479
    %v485 = vld [vmem:[#allocation2 + $0x100] sm:$0xf]
    %v486 = vld [vmem:[#allocation2 + $0x104] sm:$0xf]
    %v487 = vld [vmem:[#allocation2 + $0x108] sm:$0xf]
    %v488 = vld [vmem:[#allocation2 + $0x10c] sm:$0xf]
    %v489 = vld [vmem:[#allocation2 + $0x110] sm:$0xf]
    %v490 = vld [vmem:[#allocation2 + $0x114] sm:$0xf]
    %v491 = vld [vmem:[#allocation2 + $0x118] sm:$0xf]
    %v492 = vld [vmem:[#allocation2 + $0x11c] sm:$0xf]
    %v493 = vld [vmem:[#allocation2 + $0x120] sm:$0xf]
    %v494 = vld [vmem:[#allocation2 + $0x124] sm:$0xf]
    %v495 = vld [vmem:[#allocation2 + $0x128] sm:$0xf]
    %v496 = vld [vmem:[#allocation2 + $0x12c] sm:$0xf]
    %v497 = vld [vmem:[#allocation2 + $0x130] sm:$0xf]
    %v498 = vld [vmem:[#allocation2 + $0x134] sm:$0xf]
    %v499 = vld [vmem:[#allocation2 + $0x138] sm:$0xf]
    %v500 = vld [vmem:[#allocation2 + $0x13c] sm:$0xf]
    %v501 = vpack.c.bf16 %v484, %v484
    %v502 = vld [vmem:[%s2 + $0x4] sm:$0x1]
    %v503 = vlaneseq
    %v504 = vshrl.u32 %v503, 7
    %v505 = vsub.s32 0, %v504
    %v506 = vrot.slane %v502, %v505
    %v523 = vunpack.c.l.b16 %v485
    %v524 = vunpack.c.l.b16 %v486
    %v525 = vunpack.c.l.b16 %v487
    %v526 = vunpack.c.l.b16 %v488
    %v527 = vunpack.c.l.b16 %v489
    %v528 = vunpack.c.l.b16 %v490
    %v529 = vunpack.c.l.b16 %v491
    %v530 = vunpack.c.l.b16 %v492
    %v531 = vunpack.c.l.b16 %v493
    %v532 = vunpack.c.l.b16 %v494
    %v533 = vunpack.c.l.b16 %v495
    %v534 = vunpack.c.l.b16 %v496
    %v535 = vunpack.c.l.b16 %v497
    %v536 = vunpack.c.l.b16 %v498
    %v537 = vunpack.c.l.b16 %v499
    %v538 = vunpack.c.l.b16 %v500
    %v539 = vpack.c.b16 %v524, %v523
    %v540 = vpack.c.b16 %v526, %v525
    %v541 = vpack.c.b16 %v528, %v527
    %v542 = vpack.c.b16 %v530, %v529
    %v543 = vpack.c.b16 %v532, %v531
    %v544 = vpack.c.b16 %v534, %v533
    %v545 = vpack.c.b16 %v536, %v535
    %v546 = vpack.c.b16 %v538, %v537
    %555 = vmatprep.subr.bf16.mxu0 0
    %556 = vmatpush1.bf16.msra.mxu0 %v539
    %557 = vmatprep.subr.bf16.mxu0 0
    %558 = vmatpush1.bf16.msra.mxu0 %v540
    %559 = vmatprep.subr.bf16.mxu0 0
    %560 = vmatpush1.bf16.msra.mxu0 %v541
    %561 = vmatprep.subr.bf16.mxu0 0
    %562 = vmatpush1.bf16.msra.mxu0 %v542
    %563 = vmatprep.subr.bf16.mxu0 0
    %564 = vmatpush1.bf16.msra.mxu0 %v543
    %565 = vmatprep.subr.bf16.mxu0 0
    %566 = vmatpush1.bf16.msra.mxu0 %v544
    %567 = vmatprep.subr.bf16.mxu0 0
    %568 = vmatpush1.bf16.msra.mxu0 %v545
    %569 = vmatprep.subr.bf16.mxu0 0
    %570 = vmatpush1.bf16.msra.mxu0 %v546
    %571 = vmatprep.subr.bf16.mxu0 0
    %572 = vmatpush1.bf16.msra.mxu0 0
    %573 = vmatprep.subr.bf16.mxu0 0
    %574 = vmatpush1.bf16.msra.mxu0 0
    %575 = vmatprep.subr.bf16.mxu0 0
    %576 = vmatpush1.bf16.msra.mxu0 0
    %577 = vmatprep.subr.bf16.mxu0 0
    %578 = vmatpush1.bf16.msra.mxu0 0
    %579 = vmatprep.subr.bf16.mxu0 0
    %580 = vmatpush1.bf16.msra.mxu0 0
    %581 = vmatprep.subr.bf16.mxu0 0
    %582 = vmatpush1.bf16.msra.mxu0 0
    %583 = vmatprep.subr.bf16.mxu0 0
    %584 = vmatpush1.bf16.msra.mxu0 0
    %585 = vmatprep.subr.bf16.mxu0 0
    %586 = vmatpush1.bf16.msra.mxu0 0
    %587 = vmatprep.mubr.bf16.mxu0 0
    %588 = vmatmul.mubr.bf16.gmra.mrb[0].mxu0 %v501
    %v589 = vpop.f32.mrb[0].mxu0
    %v590 = vadd.f32 %v506, %v589
    %v591 = vpop.f32.mrb[0].mxu0
    %v592 = vpop.f32.mrb[0].mxu0
    %v593 = vpop.f32.mrb[0].mxu0
    %594 = vdwg.mxu0
    %595 = vst [vmem:[#allocation5] sm:$0x3] %v590
    // Predicated region
    $region18: #{tpu_custom_call.1} parent=1 // pred_check
      _
    $region19: #{tpu_custom_call.1} parent=1 // pred_check_branch
      %597 = sbr.rel (0) target = $region21
    $region20: #{tpu_custom_call.1} parent=1 // pred_region
      %s599 = ssub.s32 32, 32
      %600 = vsyncadd [#allocation4], %s599
      %s602 = sshll.u32 [#allocation5], 4
      %s603 = int_to_ptr.vmem [resolvable:$true] %s602
      %605 = dma.vmem_to_hbm [thread:$0]  %s603, 32, %s3, [#allocation4]
    $region21: #{tpu_custom_call.1} parent=1 // pred_fallthru
      _
    // Predicated region
    $region22: #{tpu_custom_call.1} parent=1 // pred_check
      _
    $region23: #{tpu_custom_call.1} parent=1 // pred_check_branch
      %607 = sbr.rel (0) target = $region25
    $region24: #{tpu_custom_call.1} parent=1 // pred_region
      %608 = dma.done [#allocation4], 32
    $region25: #{tpu_custom_call.1} parent=1 // pred_fallthru
      _
    %609 = vsyncpa [#allocation3], 1
    %610 = vsyncpa [#allocation4], 1

// kernel: tpu_custom_call.1
$region0: #{tpu_custom_call.1}
  #allocation0 [shape = 'u32[]', space=smem, size = 0x4, offset = 0x4, fixed_abs, tag = 'smem constant byte address 0x4 - core index']
  #allocation1 [shape = 'u32[144,128]{1,0:T(1,128)}', space=vmem, size = 0x12000, scoped, tag = 'internal scratch']
  %s0 = inlined_call_operand.vmem [shape: f32[16,3], index: 0, kind: input, shape index: {}]
  %s1 = inlined_call_operand.hbm [shape: bf16[640,128], index: 1, kind: input, shape index: {}]
  %s2 = inlined_call_operand.vmem [shape: f32[5,128], index: 2, kind: input, shape index: {}]
  %s3 = inlined_call_operand.hbm [shape: f32[2,128], index: 3, kind: output, shape index: {}]
  %s4 = sld [smem:[#allocation0]]
  $region26: #{tpu_custom_call.1} parent=0
    _
  %s6 = ssub.s32 1, %s4
  %s7 = scalar_select 0, %s6, %s4
  $region1: #{tpu_custom_call.1} parent=0
    #allocation2 [shape = 'u8[163840]{0}', space=vmem, size = 0x28000, scoped, tag = 'input window, operand 1, single buffered']
    #allocation3 [shape = 's32[1]{0}', space=sflag, size = 0x4, scoped, tag = 'scoped memory for tpu_custom_call.1']
    #allocation4 [shape = 's32[1]{0}', space=sflag, size = 0x4, scoped, tag = 'scoped memory for tpu_custom_call.1']
    #allocation5 [shape = 'u8[1024]{0}', space=vmem, size = 0x400, scoped, tag = 'output window, operand 0, single buffered']
    %8 = vsyncpa [#allocation3], 0
    %9 = vsyncpa [#allocation4], 0
    // Predicated region
    $region2: #{tpu_custom_call.1} parent=1 // pred_check
      _
    $region3: #{tpu_custom_call.1} parent=1 // pred_check_branch
      %11 = sbr.rel (0) target = $region5
    $region4: #{tpu_custom_call.1} parent=1 // pred_region
      _
    $region5: #{tpu_custom_call.1} parent=1 // pred_fallthru
      _
    // Predicated region
    $region6: #{tpu_custom_call.1} parent=1 // pred_check
      _
    $region7: #{tpu_custom_call.1} parent=1 // pred_check_branch
      %13 = sbr.rel (0) target = $region9
    $region8: #{tpu_custom_call.1} parent=1 // pred_region
      %s15 = ssub.s32 5120, 5120
      %16 = vsyncadd [#allocation3], %s15
      %s17 = sshll.u32 [#allocation2], 4
      %s18 = int_to_ptr.vmem [resolvable:$true] %s17
      %23 = dma.hbm_to_vmem [thread:$0]  %s1, 5120, %s18, [#allocation3], 64, 64, 4
    $region9: #{tpu_custom_call.1} parent=1 // pred_fallthru
      _
    // Predicated region
    $region10: #{tpu_custom_call.1} parent=1 // pred_check
      _
    $region11: #{tpu_custom_call.1} parent=1 // pred_check_branch
      %25 = sbr.rel (0) target = $region13
    $region12: #{tpu_custom_call.1} parent=1 // pred_region
      _
    $region13: #{tpu_custom_call.1} parent=1 // pred_fallthru
      _
    // Predicated region
    $region14: #{tpu_custom_call.1} parent=1 // pred_check
      _
    $region15: #{tpu_custom_call.1} parent=1 // pred_check_branch
      %27 = sbr.rel (0) target = $region17
    $region16: #{tpu_custom_call.1} parent=1 // pred_region
      %28 = dma.done [#allocation3], 5120
    $region17: #{tpu_custom_call.1} parent=1 // pred_fallthru
      _
    %v30 = vld [vmem:[#allocation2] sm:$0x3]
    %v31 = vunpack.c.l.bf16 %v30
    %v32 = vld [vmem:[%s0] sm:$0xff]
    %v33 = vld [vmem:[%s0 + $0x8] sm:$0xff]
    %v34 = vld [vmem:[%s2] sm:$0x1]
    %v35 = vlaneseq
    %v36 = vshrl.u32 %v35, 7
    %v37 = vsub.s32 0, %v36
    %v38 = vrot.slane %v34, %v37
    %vm39 = vcmask 23552
    %v41 = vsel %vm39, %v32, 0
    %v44 = vsel %vm39, %v33, 0
    %vm46 = vcmask 1042432
    %v48 = vsel %vm46, %v31, 0
    %50 = vmatprep.subr.mxu0 0.0
    %51 = vmatpush1.msra.mxu0 %v48
    %52 = vmatprep.subr.mxu0 0.0
    %53 = vmatpush1.msra.mxu0 0.0
    %54 = vmatprep.subr.mxu0 0.0
    %55 = vmatpush1.msra.mxu0 0.0
    %56 = vmatprep.subr.mxu0 0.0
    %57 = vmatpush1.msra.mxu0 0.0
    %58 = vmatprep.subr.mxu0 0.0
    %59 = vmatpush1.msra.mxu0 0.0
    %60 = vmatprep.subr.mxu0 0.0
    %61 = vmatpush1.msra.mxu0 0.0
    %62 = vmatprep.subr.mxu0 0.0
    %63 = vmatpush1.msra.mxu0 0.0
    %64 = vmatprep.subr.mxu0 0.0
    %65 = vmatpush1.msra.mxu0 0.0
    %66 = vmatprep.subr.mxu0 0.0
    %67 = vmatpush1.msra.mxu0 0.0
    %68 = vmatprep.subr.mxu0 0.0
    %69 = vmatpush1.msra.mxu0 0.0
    %70 = vmatprep.subr.mxu0 0.0
    %71 = vmatpush1.msra.mxu0 0.0
    %72 = vmatprep.subr.mxu0 0.0
    %73 = vmatpush1.msra.mxu0 0.0
    %74 = vmatprep.subr.mxu0 0.0
    %75 = vmatpush1.msra.mxu0 0.0
    %76 = vmatprep.subr.mxu0 0.0
    %77 = vmatpush1.msra.mxu0 0.0
    %78 = vmatprep.subr.mxu0 0.0
    %79 = vmatpush1.msra.mxu0 0.0
    %80 = vmatprep.subr.mxu0 0.0
    %81 = vmatpush1.msra.mxu0 0.0
    %82 = vmatprep.subr.mxu0 0.0
    %83 = vmatpush1.msra.mxu0 0.0
    %84 = vmatprep.subr.mxu0 0.0
    %85 = vmatpush1.msra.mxu0 0.0
    %86 = vmatprep.subr.mxu0 0.0
    %87 = vmatpush1.msra.mxu0 0.0
    %88 = vmatprep.subr.mxu0 0.0
    %89 = vmatpush1.msra.mxu0 0.0
    %90 = vmatprep.subr.mxu0 0.0
    %91 = vmatpush1.msra.mxu0 0.0
    %92 = vmatprep.subr.mxu0 0.0
    %93 = vmatpush1.msra.mxu0 0.0
    %94 = vmatprep.subr.mxu0 0.0
    %95 = vmatpush1.msra.mxu0 0.0
    %96 = vmatprep.subr.mxu0 0.0
    %97 = vmatpush1.msra.mxu0 0.0
    %98 = vmatprep.subr.mxu0 0.0
    %99 = vmatpush1.msra.mxu0 0.0
    %100 = vmatprep.subr.mxu0 0.0
    %101 = vmatpush1.msra.mxu0 0.0
    %102 = vmatprep.subr.mxu0 0.0
    %103 = vmatpush1.msra.mxu0 0.0
    %104 = vmatprep.subr.mxu0 0.0
    %105 = vmatpush1.msra.mxu0 0.0
    %106 = vmatprep.subr.mxu0 0.0
    %107 = vmatpush1.msra.mxu0 0.0
    %108 = vmatprep.subr.mxu0 0.0
    %109 = vmatpush1.msra.mxu0 0.0
    %110 = vmatprep.subr.mxu0 0.0
    %111 = vmatpush1.msra.mxu0 0.0
    %112 = vmatprep.subr.mxu0 0.0
    %113 = vmatpush1.msra.mxu0 0.0
    %114 = vmatprep.mubr.f32.mxu0 0.0
    %115 = vmatmul.mubr.f32.gmra.mrb[0].mxu0 %v41
    %v116 = vpop.f32.mrb[0].mxu0
    %v117 = vadd.f32 %v38, %v116
    %v118 = vpop.f32.mrb[0].mxu0
    %119 = vmatprep.mubr.f32.mxu0 0.0
    %120 = vmatmul.mubr.f32.gmra.mrb[0].mxu0 %v44
    %v121 = vpop.f32.mrb[0].mxu0
    %v122 = vadd.f32 %v38, %v121
    %v123 = vpop.f32.mrb[0].mxu0
    %124 = vdwg.mxu0
    %v125 = vtanh.pop %v117
    %v126 = vtanh.pop %v122
    %v127 = vld [vmem:[#allocation2 + $0x40] sm:$0xf]
    %v128 = vld [vmem:[#allocation2 + $0x44] sm:$0xf]
    %v129 = vld [vmem:[#allocation2 + $0x48] sm:$0xf]
    %v130 = vld [vmem:[#allocation2 + $0x4c] sm:$0xf]
    %v131 = vld [vmem:[#allocation2 + $0x50] sm:$0xf]
    %v132 = vld [vmem:[#allocation2 + $0x54] sm:$0xf]
    %v133 = vld [vmem:[#allocation2 + $0x58] sm:$0xf]
    %v134 = vld [vmem:[#allocation2 + $0x5c] sm:$0xf]
    %v135 = vld [vmem:[#allocation2 + $0x60] sm:$0xf]
    %v136 = vld [vmem:[#allocation2 + $0x64] sm:$0xf]
    %v137 = vld [vmem:[#allocation2 + $0x68] sm:$0xf]
    %v138 = vld [vmem:[#allocation2 + $0x6c] sm:$0xf]
    %v139 = vld [vmem:[#allocation2 + $0x70] sm:$0xf]
    %v140 = vld [vmem:[#allocation2 + $0x74] sm:$0xf]
    %v141 = vld [vmem:[#allocation2 + $0x78] sm:$0xf]
    %v142 = vld [vmem:[#allocation2 + $0x7c] sm:$0xf]
    %v143 = vpack.c.bf16 %v126, %v125
    %v144 = vld [vmem:[%s2 + $0x1] sm:$0x1]
    %v145 = vlaneseq
    %v146 = vshrl.u32 %v145, 7
    %v147 = vsub.s32 0, %v146
    %v148 = vrot.slane %v144, %v147
    %v165 = vunpack.c.l.b16 %v127
    %v166 = vunpack.c.l.b16 %v128
    %v167 = vunpack.c.l.b16 %v129
    %v168 = vunpack.c.l.b16 %v130
    %v169 = vunpack.c.l.b16 %v131
    %v170 = vunpack.c.l.b16 %v132
    %v171 = vunpack.c.l.b16 %v133
    %v172 = vunpack.c.l.b16 %v134
    %v173 = vunpack.c.l.b16 %v135
    %v174 = vunpack.c.l.b16 %v136
    %v175 = vunpack.c.l.b16 %v137
    %v176 = vunpack.c.l.b16 %v138
    %v177 = vunpack.c.l.b16 %v139
    %v178 = vunpack.c.l.b16 %v140
    %v179 = vunpack.c.l.b16 %v141
    %v180 = vunpack.c.l.b16 %v142
    %v181 = vpack.c.b16 %v166, %v165
    %v182 = vpack.c.b16 %v168, %v167
    %v183 = vpack.c.b16 %v170, %v169
    %v184 = vpack.c.b16 %v172, %v171
    %v185 = vpack.c.b16 %v174, %v173
    %v186 = vpack.c.b16 %v176, %v175
    %v187 = vpack.c.b16 %v178, %v177
    %v188 = vpack.c.b16 %v180, %v179
    %197 = vmatprep.subr.bf16.mxu0 0
    %198 = vmatpush1.bf16.msra.mxu0 %v181
    %199 = vmatprep.subr.bf16.mxu0 0
    %200 = vmatpush1.bf16.msra.mxu0 %v182
    %201 = vmatprep.subr.bf16.mxu0 0
    %202 = vmatpush1.bf16.msra.mxu0 %v183
    %203 = vmatprep.subr.bf16.mxu0 0
    %204 = vmatpush1.bf16.msra.mxu0 %v184
    %205 = vmatprep.subr.bf16.mxu0 0
    %206 = vmatpush1.bf16.msra.mxu0 %v185
    %207 = vmatprep.subr.bf16.mxu0 0
    %208 = vmatpush1.bf16.msra.mxu0 %v186
    %209 = vmatprep.subr.bf16.mxu0 0
    %210 = vmatpush1.bf16.msra.mxu0 %v187
    %211 = vmatprep.subr.bf16.mxu0 0
    %212 = vmatpush1.bf16.msra.mxu0 %v188
    %213 = vmatprep.subr.bf16.mxu0 0
    %214 = vmatpush1.bf16.msra.mxu0 0
    %215 = vmatprep.subr.bf16.mxu0 0
    %216 = vmatpush1.bf16.msra.mxu0 0
    %217 = vmatprep.subr.bf16.mxu0 0
    %218 = vmatpush1.bf16.msra.mxu0 0
    %219 = vmatprep.subr.bf16.mxu0 0
    %220 = vmatpush1.bf16.msra.mxu0 0
    %221 = vmatprep.subr.bf16.mxu0 0
    %222 = vmatpush1.bf16.msra.mxu0 0
    %223 = vmatprep.subr.bf16.mxu0 0
    %224 = vmatpush1.bf16.msra.mxu0 0
    %225 = vmatprep.subr.bf16.mxu0 0
    %226 = vmatpush1.bf16.msra.mxu0 0
    %227 = vmatprep.subr.bf16.mxu0 0
    %228 = vmatpush1.bf16.msra.mxu0 0
    %229 = vmatprep.mubr.bf16.mxu0 0
    %230 = vmatmul.mubr.bf16.gmra.mrb[0].mxu0 %v143
    %v231 = vpop.f32.mrb[0].mxu0
    %v232 = vadd.f32 %v148, %v231
    %v233 = vpop.f32.mrb[0].mxu0
    %v234 = vpop.f32.mrb[0].mxu0
    %v235 = vadd.f32 %v148, %v234
    %v236 = vpop.f32.mrb[0].mxu0
    %237 = vdwg.mxu0
    %v238 = vtanh.pop %v232
    %v239 = vtanh.pop %v235
    %v240 = vld [vmem:[#allocation2 + $0x80] sm:$0xf]
    %v241 = vld [vmem:[#allocation2 + $0x84] sm:$0xf]
    %v242 = vld [vmem:[#allocation2 + $0x88] sm:$0xf]
    %v243 = vld [vmem:[#allocation2 + $0x8c] sm:$0xf]
    %v244 = vld [vmem:[#allocation2 + $0x90] sm:$0xf]
    %v245 = vld [vmem:[#allocation2 + $0x94] sm:$0xf]
    %v246 = vld [vmem:[#allocation2 + $0x98] sm:$0xf]
    %v247 = vld [vmem:[#allocation2 + $0x9c] sm:$0xf]
    %v248 = vld [vmem:[#allocation2 + $0xa0] sm:$0xf]
    %v249 = vld [vmem:[#allocation2 + $0xa4] sm:$0xf]
    %v250 = vld [vmem:[#allocation2 + $0xa8] sm:$0xf]
    %v251 = vld [vmem:[#allocation2 + $0xac] sm:$0xf]
    %v252 = vld [vmem:[#allocation2 + $0xb0] sm:$0xf]
    %v253 = vld [vmem:[#allocation2 + $0xb4] sm:$0xf]
    %v254 = vld [vmem:[#allocation2 + $0xb8] sm:$0xf]
    %v255 = vld [vmem:[#allocation2 + $0xbc] sm:$0xf]
    %v256 = vpack.c.bf16 %v239, %v238
    %v257 = vld [vmem:[%s2 + $0x2] sm:$0x1]
    %v258 = vlaneseq
    %v259 = vshrl.u32 %v258, 7
    %v260 = vsub.s32 0, %v259
    %v261 = vrot.slane %v257, %v260
    %v278 = vunpack.c.l.b16 %v240
    %v279 = vunpack.c.l.b16 %v241
    %v280 = vunpack.c.l.b16 %v242
    %v281 = vunpack.c.l.b16 %v243
    %v282 = vunpack.c.l.b16 %v244
    %v283 = vunpack.c.l.b16 %v245
    %v284 = vunpack.c.l.b16 %v246
    %v285 = vunpack.c.l.b16 %v247
    %v286 = vunpack.c.l.b16 %v248
    %v287 = vunpack.c.l.b16 %v249
    %v288 = vunpack.c.l.b16 %v250
    %v289 = vunpack.c.l.b16 %v251
    %v290 = vunpack.c.l.b16 %v252
    %v291 = vunpack.c.l.b16 %v253
    %v292 = vunpack.c.l.b16 %v254
    %v293 = vunpack.c.l.b16 %v255
    %v294 = vpack.c.b16 %v279, %v278
    %v295 = vpack.c.b16 %v281, %v280
    %v296 = vpack.c.b16 %v283, %v282
    %v297 = vpack.c.b16 %v285, %v284
    %v298 = vpack.c.b16 %v287, %v286
    %v299 = vpack.c.b16 %v289, %v288
    %v300 = vpack.c.b16 %v291, %v290
    %v301 = vpack.c.b16 %v293, %v292
    %310 = vmatprep.subr.bf16.mxu0 0
    %311 = vmatpush1.bf16.msra.mxu0 %v294
    %312 = vmatprep.subr.bf16.mxu0 0
    %313 = vmatpush1.bf16.msra.mxu0 %v295
    %314 = vmatprep.subr.bf16.mxu0 0
    %315 = vmatpush1.bf16.msra.mxu0 %v296
    %316 = vmatprep.subr.bf16.mxu0 0
    %317 = vmatpush1.bf16.msra.mxu0 %v297
    %318 = vmatprep.subr.bf16.mxu0 0
    %319 = vmatpush1.bf16.msra.mxu0 %v298
    %320 = vmatprep.subr.bf16.mxu0 0
    %321 = vmatpush1.bf16.msra.mxu0 %v299
    %322 = vmatprep.subr.bf16.mxu0 0
    %323 = vmatpush1.bf16.msra.mxu0 %v300
    %324 = vmatprep.subr.bf16.mxu0 0
    %325 = vmatpush1.bf16.msra.mxu0 %v301
    %326 = vmatprep.subr.bf16.mxu0 0
    %327 = vmatpush1.bf16.msra.mxu0 0
    %328 = vmatprep.subr.bf16.mxu0 0
    %329 = vmatpush1.bf16.msra.mxu0 0
    %330 = vmatprep.subr.bf16.mxu0 0
    %331 = vmatpush1.bf16.msra.mxu0 0
    %332 = vmatprep.subr.bf16.mxu0 0
    %333 = vmatpush1.bf16.msra.mxu0 0
    %334 = vmatprep.subr.bf16.mxu0 0
    %335 = vmatpush1.bf16.msra.mxu0 0
    %336 = vmatprep.subr.bf16.mxu0 0
    %337 = vmatpush1.bf16.msra.mxu0 0
    %338 = vmatprep.subr.bf16.mxu0 0
    %339 = vmatpush1.bf16.msra.mxu0 0
    %340 = vmatprep.subr.bf16.mxu0 0
    %341 = vmatpush1.bf16.msra.mxu0 0
    %342 = vmatprep.mubr.bf16.mxu0 0
    %343 = vmatmul.mubr.bf16.gmra.mrb[0].mxu0 %v256
    %v344 = vpop.f32.mrb[0].mxu0
    %v345 = vadd.f32 %v261, %v344
    %v346 = vpop.f32.mrb[0].mxu0
    %v347 = vpop.f32.mrb[0].mxu0
    %v348 = vadd.f32 %v261, %v347
    %v349 = vpop.f32.mrb[0].mxu0
    %350 = vdwg.mxu0
    %v351 = vtanh.pop %v345
    %v352 = vtanh.pop %v348
    %v353 = vrot.slane %v351, 4
    %v354 = vadd.f32 %v351, %v353
    %v355 = vrot.slane %v354, 2
    %v356 = vadd.f32 %v354, %v355
    %v357 = vrot.slane %v356, 1
    %v358 = vadd.f32 %v356, %v357
    %v359 = vrot.slane %v352, 4
    %v360 = vadd.f32 %v352, %v359
    %v361 = vrot.slane %v360, 2
    %v362 = vadd.f32 %v360, %v361
    %v363 = vrot.slane %v362, 1
    %v364 = vadd.f32 %v362, %v363
    %v365 = vld [vmem:[#allocation2 + $0xc0] sm:$0xf]
    %v366 = vld [vmem:[#allocation2 + $0xc4] sm:$0xf]
    %v367 = vld [vmem:[#allocation2 + $0xc8] sm:$0xf]
    %v368 = vld [vmem:[#allocation2 + $0xcc] sm:$0xf]
    %v369 = vld [vmem:[#allocation2 + $0xd0] sm:$0xf]
    %v370 = vld [vmem:[#allocation2 + $0xd4] sm:$0xf]
    %v371 = vld [vmem:[#allocation2 + $0xd8] sm:$0xf]
    %v372 = vld [vmem:[#allocation2 + $0xdc] sm:$0xf]
    %v373 = vld [vmem:[#allocation2 + $0xe0] sm:$0xf]
    %v374 = vld [vmem:[#allocation2 + $0xe4] sm:$0xf]
    %v375 = vld [vmem:[#allocation2 + $0xe8] sm:$0xf]
    %v376 = vld [vmem:[#allocation2 + $0xec] sm:$0xf]
    %v377 = vld [vmem:[#allocation2 + $0xf0] sm:$0xf]
    %v378 = vld [vmem:[#allocation2 + $0xf4] sm:$0xf]
    %v379 = vld [vmem:[#allocation2 + $0xf8] sm:$0xf]
    %v380 = vld [vmem:[#allocation2 + $0xfc] sm:$0xf]
    %v381 = vpack.c.bf16 %v358, %v358
    %v382 = vpack.c.bf16 %v364, %v364
    %v383 = vld [vmem:[%s2 + $0x3] sm:$0x1]
    %v384 = vlaneseq
    %v385 = vshrl.u32 %v384, 7
    %v386 = vsub.s32 0, %v385
    %v387 = vrot.slane %v383, %v386
    %v390 = vunpack.c.l.b16 %v381
    %v391 = vunpack.c.l.b16 %v382
    %vm392 = vcmask 1041409
    %v393 = vsel %vm392, %v391, %v390
    %v394 = vpack.c.b16 %v393, %v393
    %v412 = vunpack.c.l.b16 %v365
    %v413 = vunpack.c.l.b16 %v366
    %v414 = vunpack.c.l.b16 %v367
    %v415 = vunpack.c.l.b16 %v368
    %v416 = vunpack.c.l.b16 %v369
    %v417 = vunpack.c.l.b16 %v370
    %v418 = vunpack.c.l.b16 %v371
    %v419 = vunpack.c.l.b16 %v372
    %v420 = vunpack.c.l.b16 %v373
    %v421 = vunpack.c.l.b16 %v374
    %v422 = vunpack.c.l.b16 %v375
    %v423 = vunpack.c.l.b16 %v376
    %v424 = vunpack.c.l.b16 %v377
    %v425 = vunpack.c.l.b16 %v378
    %v426 = vunpack.c.l.b16 %v379
    %v427 = vunpack.c.l.b16 %v380
    %v428 = vpack.c.b16 %v413, %v412
    %v429 = vpack.c.b16 %v415, %v414
    %v430 = vpack.c.b16 %v417, %v416
    %v431 = vpack.c.b16 %v419, %v418
    %v432 = vpack.c.b16 %v421, %v420
    %v433 = vpack.c.b16 %v423, %v422
    %v434 = vpack.c.b16 %v425, %v424
    %v435 = vpack.c.b16 %v427, %v426
    %444 = vmatprep.subr.bf16.mxu0 0
    %445 = vmatpush1.bf16.msra.mxu0 %v428
    %446 = vmatprep.subr.bf16.mxu0 0
    %447 = vmatpush1.bf16.msra.mxu0 %v429
    %448 = vmatprep.subr.bf16.mxu0 0
    %449 = vmatpush1.bf16.msra.mxu0 %v430
    %450 = vmatprep.subr.bf16.mxu0 0
    %451 = vmatpush1.bf16.msra.mxu0 %v431
    %452 = vmatprep.subr.bf16.mxu0 0
    %453 = vmatpush1.bf16.msra.mxu0 %v432
    %454 = vmatprep.subr.bf16.mxu0 0
    %455 = vmatpush1.bf16.msra.mxu0 %v433
    %456 = vmatprep.subr.bf16.mxu0 0
    %457 = vmatpush1.bf16.msra.mxu0 %v434
    %458 = vmatprep.subr.bf16.mxu0 0
    %459 = vmatpush1.bf16.msra.mxu0 %v435
    %460 = vmatprep.subr.bf16.mxu0 0
    %461 = vmatpush1.bf16.msra.mxu0 0
    %462 = vmatprep.subr.bf16.mxu0 0
    %463 = vmatpush1.bf16.msra.mxu0 0
    %464 = vmatprep.subr.bf16.mxu0 0
    %465 = vmatpush1.bf16.msra.mxu0 0
    %466 = vmatprep.subr.bf16.mxu0 0
    %467 = vmatpush1.bf16.msra.mxu0 0
    %468 = vmatprep.subr.bf16.mxu0 0
    %469 = vmatpush1.bf16.msra.mxu0 0
    %470 = vmatprep.subr.bf16.mxu0 0
    %471 = vmatpush1.bf16.msra.mxu0 0
    %472 = vmatprep.subr.bf16.mxu0 0
    %473 = vmatpush1.bf16.msra.mxu0 0
    %474 = vmatprep.subr.bf16.mxu0 0
    %475 = vmatpush1.bf16.msra.mxu0 0
    %476 = vmatprep.mubr.bf16.mxu0 0
    %477 = vmatmul.mubr.bf16.gmra.mrb[0].mxu0 %v394
    %v478 = vpop.f32.mrb[0].mxu0
    %v479 = vadd.f32 %v387, %v478
    %v480 = vpop.f32.mrb[0].mxu0
    %v481 = vpop.f32.mrb[0].mxu0
    %v482 = vpop.f32.mrb[0].mxu0
    %483 = vdwg.mxu0
    %v484 = vtanh.pop %v479
    %v485 = vld [vmem:[#allocation2 + $0x100] sm:$0xf]
    %v486 = vld [vmem:[#allocation2 + $0x104] sm:$0xf]
    %v487 = vld [vmem:[#allocation2 + $0x108] sm:$0xf]
    %v488 = vld [vmem:[#allocation2 + $0x10c] sm:$0xf]
    %v489 = vld [vmem:[#allocation2 + $0x110] sm:$0xf]
    %v490 = vld [vmem:[#allocation2 + $0x114] sm:$0xf]
    %v491 = vld [vmem:[#allocation2 + $0x118] sm:$0xf]
    %v492 = vld [vmem:[#allocation2 + $0x11c] sm:$0xf]
    %v493 = vld [vmem:[#allocation2 + $0x120] sm:$0xf]
    %v494 = vld [vmem:[#allocation2 + $0x124] sm:$0xf]
    %v495 = vld [vmem:[#allocation2 + $0x128] sm:$0xf]
    %v496 = vld [vmem:[#allocation2 + $0x12c] sm:$0xf]
    %v497 = vld [vmem:[#allocation2 + $0x130] sm:$0xf]
    %v498 = vld [vmem:[#allocation2 + $0x134] sm:$0xf]
    %v499 = vld [vmem:[#allocation2 + $0x138] sm:$0xf]
    %v500 = vld [vmem:[#allocation2 + $0x13c] sm:$0xf]
    %v501 = vpack.c.bf16 %v484, %v484
    %v502 = vld [vmem:[%s2 + $0x4] sm:$0x1]
    %v503 = vlaneseq
    %v504 = vshrl.u32 %v503, 7
    %v505 = vsub.s32 0, %v504
    %v506 = vrot.slane %v502, %v505
    %v523 = vunpack.c.l.b16 %v485
    %v524 = vunpack.c.l.b16 %v486
    %v525 = vunpack.c.l.b16 %v487
    %v526 = vunpack.c.l.b16 %v488
    %v527 = vunpack.c.l.b16 %v489
    %v528 = vunpack.c.l.b16 %v490
    %v529 = vunpack.c.l.b16 %v491
    %v530 = vunpack.c.l.b16 %v492
    %v531 = vunpack.c.l.b16 %v493
    %v532 = vunpack.c.l.b16 %v494
    %v533 = vunpack.c.l.b16 %v495
    %v534 = vunpack.c.l.b16 %v496
    %v535 = vunpack.c.l.b16 %v497
    %v536 = vunpack.c.l.b16 %v498
    %v537 = vunpack.c.l.b16 %v499
    %v538 = vunpack.c.l.b16 %v500
    %v539 = vpack.c.b16 %v524, %v523
    %v540 = vpack.c.b16 %v526, %v525
    %v541 = vpack.c.b16 %v528, %v527
    %v542 = vpack.c.b16 %v530, %v529
    %v543 = vpack.c.b16 %v532, %v531
    %v544 = vpack.c.b16 %v534, %v533
    %v545 = vpack.c.b16 %v536, %v535
    %v546 = vpack.c.b16 %v538, %v537
    %555 = vmatprep.subr.bf16.mxu0 0
    %556 = vmatpush1.bf16.msra.mxu0 %v539
    %557 = vmatprep.subr.bf16.mxu0 0
    %558 = vmatpush1.bf16.msra.mxu0 %v540
    %559 = vmatprep.subr.bf16.mxu0 0
    %560 = vmatpush1.bf16.msra.mxu0 %v541
    %561 = vmatprep.subr.bf16.mxu0 0
    %562 = vmatpush1.bf16.msra.mxu0 %v542
    %563 = vmatprep.subr.bf16.mxu0 0
    %564 = vmatpush1.bf16.msra.mxu0 %v543
    %565 = vmatprep.subr.bf16.mxu0 0
    %566 = vmatpush1.bf16.msra.mxu0 %v544
    %567 = vmatprep.subr.bf16.mxu0 0
    %568 = vmatpush1.bf16.msra.mxu0 %v545
    %569 = vmatprep.subr.bf16.mxu0 0
    %570 = vmatpush1.bf16.msra.mxu0 %v546
    %571 = vmatprep.subr.bf16.mxu0 0
    %572 = vmatpush1.bf16.msra.mxu0 0
    %573 = vmatprep.subr.bf16.mxu0 0
    %574 = vmatpush1.bf16.msra.mxu0 0
    %575 = vmatprep.subr.bf16.mxu0 0
    %576 = vmatpush1.bf16.msra.mxu0 0
    %577 = vmatprep.subr.bf16.mxu0 0
    %578 = vmatpush1.bf16.msra.mxu0 0
    %579 = vmatprep.subr.bf16.mxu0 0
    %580 = vmatpush1.bf16.msra.mxu0 0
    %581 = vmatprep.subr.bf16.mxu0 0
    %582 = vmatpush1.bf16.msra.mxu0 0
    %583 = vmatprep.subr.bf16.mxu0 0
    %584 = vmatpush1.bf16.msra.mxu0 0
    %585 = vmatprep.subr.bf16.mxu0 0
    %586 = vmatpush1.bf16.msra.mxu0 0
    %587 = vmatprep.mubr.bf16.mxu0 0
    %588 = vmatmul.mubr.bf16.gmra.mrb[0].mxu0 %v501
    %v589 = vpop.f32.mrb[0].mxu0
    %v590 = vadd.f32 %v506, %v589
    %v591 = vpop.f32.mrb[0].mxu0
    %v592 = vpop.f32.mrb[0].mxu0
    %v593 = vpop.f32.mrb[0].mxu0
    %594 = vdwg.mxu0
    %595 = vst [vmem:[#allocation5] sm:$0x3] %v590
    // Predicated region
    $region18: #{tpu_custom_call.1} parent=1 // pred_check
      _
    $region19: #{tpu_custom_call.1} parent=1 // pred_check_branch
      %597 = sbr.rel (0) target = $region21
    $region20: #{tpu_custom_call.1} parent=1 // pred_region
      %s599 = ssub.s32 32, 32
      %600 = vsyncadd [#allocation4], %s599
      %s602 = sshll.u32 [#allocation5], 4
      %s603 = int_to_ptr.vmem [resolvable:$true] %s602
      %605 = dma.vmem_to_hbm [thread:$0]  %s603, 32, %s3, [#allocation4]
    $region21: #{tpu_custom_call.1} parent=1 // pred_fallthru
      _
    // Predicated region
    $region22: #{tpu_custom_call.1} parent=1 // pred_check
      _
    $region23: #{tpu_custom_call.1} parent=1 // pred_check_branch
      %607 = sbr.rel (0) target = $region25
    $region24: #{tpu_custom_call.1} parent=1 // pred_region
      %608 = dma.done [#allocation4], 32
    $region25: #{tpu_custom_call.1} parent=1 // pred_fallthru
      _
    %609 = vsyncpa [#allocation3], 1
    %610 = vsyncpa [#allocation4], 1

</llo_original>
